<compile_context>
chip_gen: v5e
topology: v5e:2x2
jax: 0.10.0
libtpu: 0.0.40
codegen_flags: <defaults>
</compile_context>

<pallas_src>
import functools
import math

import jax
import jax.numpy as jnp
from jax.experimental import pallas as pl
from jax.experimental.pallas import tpu as pltpu


def _round_up(a, b):
    return (a + b - 1) // b * b


# -----------------------------------------------------------------------------
# Generation-aware sizing helpers (all guarded; safe fallbacks everywhere).
# -----------------------------------------------------------------------------
def _tpu_info_int(attr_names, default):
    try:
        info = pltpu.get_tpu_info()
    except Exception:
        return default
    for name in attr_names:
        val = getattr(info, name, None)
        if val:
            try:
                return int(val)
            except Exception:
                continue
    return default


def _vmem_physical_bytes():
    # Per-core VMEM: 128 MiB on v5e/v6e, 64 MiB on v7x. Conservative fallback.
    return _tpu_info_int(("vmem_capacity_bytes", "vmem_bytes"), 64 * 1024 * 1024)


def _num_tensorcores():
    # v5e/v6e: 1 TensorCore/chip; v7x: 2.  A batch-group "parallel" split is
    # only worthwhile with >=2 cores — on a 1-TC chip it would DOUBLE the
    # serial matmul chain of the recurrence.
    n = _tpu_info_int(
        ("num_cores", "core_count", "num_tensorcores", "tensorcore_count"), 0)
    if n >= 2:
        return n
    try:
        kind = jax.devices()[0].device_kind.lower()
        if "v7" in kind or "7x" in kind:
            return 2
    except Exception:
        pass
    return 1


def _recurrence_tc_cap(bg, hp, op, whh_itemsize, budget_bytes):
    """Largest time-chunk (multiple of 8, <=64) whose double-buffered streamed
    blocks plus resident weights fit the VMEM budget."""
    resident = whh_itemsize * hp * hp + 4 * (hp * op + hp + op) + 4 * bg * hp
    per_step = 2 * 4 * bg * (2 * hp + op)   # 2 buffers x (xw + rnn + logits)
    cap = (budget_bytes - resident) // max(per_step, 1)
    return int(max(8, min(64, (cap // 8) * 8)))


def _pick_time_chunk(T, tc_cap):
    """Minimize (padded serial steps + ~4-step per-chunk overhead); prefer
    larger chunks on ties.  Avoids e.g. T=100 -> Tp=128 pure serial waste."""
    hi = min(tc_cap, _round_up(T, 8))
    best_c, best_cost = 8, None
    for c in range(8, hi + 1, 8):
        n = -(-T // c)
        cost = n * c + 4 * n
        if best_cost is None or cost < best_cost or (cost == best_cost and c > best_c):
            best_c, best_cost = c, cost
    return best_c


# -----------------------------------------------------------------------------
# Fully-parallel dense kernel: o = x @ w + b, tiled over rows (stage 1).
# -----------------------------------------------------------------------------
def _dense_kernel(x_ref, w_ref, b_ref, o_ref):
    o_ref[...] = (
        jnp.dot(x_ref[...], w_ref[...], preferred_element_type=jnp.float32)
        + b_ref[...].astype(jnp.float32)
    ).astype(o_ref.dtype)


def _dense(x2d, w, b, *, max_block_rows=1024, vmem_cap=48 * 1024 * 1024):
    """x2d: (M, K), w: (K, N), b: (1, N)  ->  (M, N).  N must be lane-dense."""
    M, K = x2d.shape
    N = w.shape[1]
    itemsize = jnp.dtype(x2d.dtype).itemsize
    resident = itemsize * (K * N + N)
    tm = min(max_block_rows, _round_up(M, 8))
    # Shrink the row tile until resident weight + double-buffered blocks fit.
    while tm > 8 and resident + 2 * itemsize * tm * (K + N) > int(vmem_cap * 0.8):
        tm = max(8, _round_up(tm // 2, 8))
    Mp = _round_up(M, tm)
    if Mp != M:
        x2d = jnp.pad(x2d, ((0, Mp - M), (0, 0)))
    limit = int(min(max(resident + 2 * itemsize * tm * (K + N) + (4 << 20),
                        32 * 1024 * 1024), vmem_cap))
    out = pl.pallas_call(
        _dense_kernel,
        out_shape=jax.ShapeDtypeStruct((Mp, N), x2d.dtype),
        grid_spec=pltpu.PrefetchScalarGridSpec(
            num_scalar_prefetch=0,
            grid=(Mp // tm,),
            in_specs=[
                pl.BlockSpec((tm, K), lambda i: (i, 0)),
                pl.BlockSpec((K, N), lambda i: (0, 0)),
                pl.BlockSpec((1, N), lambda i: (0, 0)),
            ],
            out_specs=pl.BlockSpec((tm, N), lambda i: (i, 0)),
        ),
        compiler_params=pltpu.CompilerParams(
            dimension_semantics=("parallel",),
            vmem_limit_bytes=limit,
        ),
    )(x2d, w, b)
    return out[:M] if Mp != M else out


# -----------------------------------------------------------------------------
# Serial recurrence kernel, time-chunked, time-major, with fused output head.
# -----------------------------------------------------------------------------
def _recurrence_kernel(threshold, tc, use_bf16, xw_ref, whh_ref, h0_ref,
                       wout_ref, bout_ref, rnn_ref, logit_ref, h_scr):
    """Grid = (batch_groups [parallel, only >1 on 2-TC chips], time_chunks [arbitrary]).

    xw_ref:    (TC, Bg, Hp)  precomputed x @ W_ih + (b_ih + b_hh), time-major
    whh_ref:   (Hp, Hp)      W_hh + I   (identity folds the leading `h +` term)
    h0_ref:    (1, Hp)       learned initial hidden state
    wout_ref:  (Hp, Op)      output-head weight (fused epilogue)
    bout_ref:  (1, Op)       output-head bias
    rnn_ref:   (TC, Bg, Hp)  thresholded hidden states for this chunk
    logit_ref: (TC, Bg, Op)  output-head logits for this chunk
    h_scr:     (Bg, Hp) f32  hidden state carried across time chunks
    """
    c = pl.program_id(1)

    @pl.when(c == 0)
    def _():
        h_scr[...] = jnp.broadcast_to(h0_ref[...].astype(jnp.float32), h_scr.shape)

    mm_dtype = jnp.bfloat16 if use_bf16 else jnp.float32
    w_hh = whh_ref[...].astype(mm_dtype)
    w_out = wout_ref[...].astype(jnp.float32)
    b_out = bout_ref[...].astype(jnp.float32)
    h = h_scr[...]
    # Fully unrolled static loop (TC capped at 64 to bound vreg pressure).
    # Per-step critical path: ONE (Bg,Hp)@(Hp,Hp) MXU op + clamp.  Per-step
    # loads/stores are dense contiguous tiles (time-major chunk), and the head
    # matmul is off the recurrence dependency chain (scheduler overlaps it).
    for lt in range(tc):
        pre = xw_ref[lt].astype(jnp.float32) + jnp.dot(
            h.astype(mm_dtype), w_hh, preferred_element_type=jnp.float32)
        h = jnp.minimum(jnp.maximum(pre, 0.0), threshold)
        rnn_ref[lt] = h.astype(rnn_ref.dtype)
        logit_ref[lt] = (jnp.dot(h, w_out, preferred_element_type=jnp.float32)
                         + b_out).astype(logit_ref.dtype)
    h_scr[...] = h


# -----------------------------------------------------------------------------
# Wrapper
# -----------------------------------------------------------------------------
def simple_rnn_forward(x, params, threshold, *, use_bf16_recurrence=False):
    """x: (B, T, D) float32. Returns (output (B,T,O), hidden (B,H), rnn_out (B,T,H)).

    use_bf16_recurrence=True runs the recurrent matmul in bf16 (MXU-native,
    ~2-3x lower per-step latency) while carrying h in f32; numerics then
    deviate slightly from the f32 PyTorch reference, so it is off by default.
    """
    B, T, D = x.shape
    H = params["w_hh"].shape[0]
    O = params["w_out"].shape[1]
    dtype = x.dtype
    thr = float(threshold)  # static Python scalar -> literal inside the kernel

    # ---- padded / folded parameters (lane-dense: H, O -> multiples of 128) ----
    Hp = _round_up(H, 128)
    Op = _round_up(O, 128)
    rec_w_dtype = jnp.bfloat16 if use_bf16_recurrence else dtype
    w_ih_p = jnp.zeros((D, Hp), dtype).at[:, :H].set(params["w_ih"])
    b_pre_p = jnp.zeros((1, Hp), dtype).at[:, :H].set(params["b_ih"] + params["b_hh"])
    w_hh_p = jnp.zeros((Hp, Hp), rec_w_dtype).at[:H, :H].set(
        (params["w_hh"] + jnp.eye(H, dtype=dtype)).astype(rec_w_dtype))  # fold h + ...
    w_out_p = jnp.zeros((Hp, Op), dtype).at[:H, :O].set(params["w_out"])
    b_out_p = jnp.zeros((1, Op), dtype).at[:, :O].set(params["b_out"])
    h0_p = jnp.zeros((1, Hp), dtype).at[:, :H].set(params["hidden_init"])

    # ---- generation-aware sizing ----
    phys_vmem = _vmem_physical_bytes()
    vmem_cap = int(phys_vmem * 0.75)
    cores = _num_tensorcores()
    G = 2 if (cores >= 2 and B >= 2) else 1       # split only on 2-TC chips (v7x)
    Bpad = _round_up(B, 16) if G == 2 else B      # sublane-full groups when split
    Bg = Bpad // G

    tc_cap = _recurrence_tc_cap(Bg, Hp, Op, jnp.dtype(rec_w_dtype).itemsize,
                                int(phys_vmem * 0.7))
    TC = _pick_time_chunk(T, tc_cap)
    Tp = _round_up(T, TC)
    n_chunks = Tp // TC

    # ---- time-major layout: per-step chunk access is a dense contiguous tile.
    x_tm = jnp.transpose(x, (1, 0, 2))            # (T, B, D)
    if Tp != T or Bpad != B:
        x_tm = jnp.pad(x_tm, ((0, Tp - T), (0, Bpad - B), (0, 0)))

    # Stage 1 (parallel): input projection hoisted off the serial path.
    xw = _dense(x_tm.reshape(Tp * Bpad, D), w_ih_p, b_pre_p,
                vmem_cap=vmem_cap).reshape(Tp, Bpad, Hp)

    # Stage 2+3 (serial in time): thresholded recurrence + fused output head.
    itemsize = jnp.dtype(dtype).itemsize
    rec_vmem = (jnp.dtype(rec_w_dtype).itemsize * Hp * Hp
                + itemsize * (Hp * Op + Hp + Op)
                + 4 * Bg * Hp
                + 2 * itemsize * TC * Bg * (2 * Hp + Op)
                + (4 << 20))
    rec_vmem = int(min(max(rec_vmem, 32 * 1024 * 1024), vmem_cap))
    flops = 2 * Bpad * Tp * Hp * (Hp + Op) + 4 * Bpad * Tp * Hp
    bytes_accessed = (itemsize * Bpad * Tp * (2 * Hp + Op)
                      + jnp.dtype(rec_w_dtype).itemsize * Hp * Hp
                      + itemsize * (Hp * Op + Hp + Op))

    kernel = functools.partial(_recurrence_kernel, thr, TC, use_bf16_recurrence)
    rnn_tm, logits_tm = pl.pallas_call(
        kernel,
        out_shape=(jax.ShapeDtypeStruct((Tp, Bpad, Hp), dtype),
                   jax.ShapeDtypeStruct((Tp, Bpad, Op), dtype)),
        grid_spec=pltpu.PrefetchScalarGridSpec(
            num_scalar_prefetch=0,
            grid=(G, n_chunks),
            in_specs=[
                pl.BlockSpec((TC, Bg, Hp), lambda g, c: (c, g, 0)),   # xw chunk
                pl.BlockSpec((Hp, Hp), lambda g, c: (0, 0)),          # W_hh + I
                pl.BlockSpec((1, Hp), lambda g, c: (0, 0)),           # h0
                pl.BlockSpec((Hp, Op), lambda g, c: (0, 0)),          # W_out
                pl.BlockSpec((1, Op), lambda g, c: (0, 0)),           # b_out
            ],
            out_specs=[
                pl.BlockSpec((TC, Bg, Hp), lambda g, c: (c, g, 0)),   # rnn_out
                pl.BlockSpec((TC, Bg, Op), lambda g, c: (c, g, 0)),   # logits
            ],
            scratch_shapes=[pltpu.VMEM((Bg, Hp), jnp.float32)],       # carried h
        ),
        compiler_params=pltpu.CompilerParams(
            dimension_semantics=("parallel", "arbitrary"),
            vmem_limit_bytes=rec_vmem,
        ),
        cost_estimate=pl.CostEstimate(
            flops=int(flops), transcendentals=0,
            bytes_accessed=int(bytes_accessed)),
    )(xw, w_hh_p, h0_p, w_out_p, b_out_p)

    rnn_out = jnp.transpose(rnn_tm[:T, :B, :H], (1, 0, 2))
    output = jnp.transpose(logits_tm[:T, :B, :O], (1, 0, 2))
    hidden = rnn_out[:, -1, :]
    return output, hidden, rnn_out


# -----------------------------------------------------------------------------
# Parameter init (mirrors init_weights_thresholded_rnn) and pure-JAX reference.
# -----------------------------------------------------------------------------
def init_params(key, input_dim, hidden_dim, output_dim, dtype=jnp.float32):
    """xavier-uniform i2h, trunc-normal(std=0.001) h2h, zero biases/hidden_init.
    Weights stored transposed to (in_features, out_features)."""
    k_ih, k_hh, k_out, k_bout = jax.random.split(key, 4)

    limit_ih = math.sqrt(6.0 / (input_dim + hidden_dim))
    w_ih = jax.random.uniform(k_ih, (input_dim, hidden_dim), dtype,
                              minval=-limit_ih, maxval=limit_ih)
    w_hh = (0.001 * jax.random.truncated_normal(
        k_hh, -2.0, 2.0, (hidden_dim, hidden_dim))).astype(dtype)
    b_ih = jnp.zeros((1, hidden_dim), dtype)
    b_hh = jnp.zeros((1, hidden_dim), dtype)
    hidden_init = jnp.zeros((1, hidden_dim), dtype)

    limit_out = 1.0 / math.sqrt(hidden_dim)
    w_out = jax.random.uniform(k_out, (hidden_dim, output_dim), dtype,
                               minval=-limit_out, maxval=limit_out)
    b_out = jax.random.uniform(k_bout, (1, output_dim), dtype,
                               minval=-limit_out, maxval=limit_out)

    return dict(w_ih=w_ih, w_hh=w_hh, b_ih=b_ih, b_hh=b_hh,
                hidden_init=hidden_init, w_out=w_out, b_out=b_out)


def _reference_forward(x, params, threshold):
    """Pure-JAX reference of the PyTorch forward for correctness checking."""
    B = x.shape[0]
    h0 = jnp.tile(params["hidden_init"], (B, 1))

    def step(h, x_t):
        pre = (h + x_t @ params["w_ih"] + params["b_ih"]
               + h @ params["w_hh"] + params["b_hh"])
        h_new = jnp.minimum(jnp.maximum(pre, 0.0), threshold)
        return h_new, h_new

    hidden, outs = jax.lax.scan(step, h0, jnp.transpose(x, (1, 0, 2)))
    rnn_out = jnp.transpose(outs, (1, 0, 2))
    output = rnn_out @ params["w_out"] + params["b_out"]
    return output, hidden, rnn_out


if __name__ == "__main__":
    B, T, D, H, O = 2, 8, 16, 32, 4
    threshold = 1.0

    key = jax.random.PRNGKey(0)
    k_x, k_p = jax.random.split(key)
    x = jax.random.normal(k_x, (B, T, D), jnp.float32)
    params = init_params(k_p, D, H, O)

    forward = jax.jit(functools.partial(simple_rnn_forward, threshold=threshold))
    output, hidden, rnn_out = forward(x, params)
    jax.block_until_ready((output, hidden, rnn_out))

    ref_output, ref_hidden, ref_rnn_out = _reference_forward(x, params, threshold)
    assert output.shape == (B, T, O)
    assert hidden.shape == (B, H)
    assert rnn_out.shape == (B, T, H)
    assert jnp.allclose(output, ref_output, rtol=1e-5, atol=1e-5)
    assert jnp.allclose(hidden, ref_hidden, rtol=1e-5, atol=1e-5)
    assert jnp.allclose(rnn_out, ref_rnn_out, rtol=1e-5, atol=1e-5)

    print("KERNEL_OK")
</pallas_src>

<mosaic_0001>
module attributes {stable_mosaic.version = 11 : i64} {
  func.func @_recurrence_kernel(%arg0: i32, %arg1: i32, %arg2: memref<8x2x128xf32, #tpu.memory_space<vmem>>, %arg3: memref<128x128xf32, #tpu.memory_space<vmem>>, %arg4: memref<1x128xf32, #tpu.memory_space<vmem>>, %arg5: memref<128x128xf32, #tpu.memory_space<vmem>>, %arg6: memref<1x128xf32, #tpu.memory_space<vmem>>, %arg7: memref<8x2x128xf32, #tpu.memory_space<vmem>>, %arg8: memref<8x2x128xf32, #tpu.memory_space<vmem>>, %arg9: memref<2x128xf32, #tpu.memory_space<vmem>>) attributes {dimension_semantics = [#tpu.dimension_semantics<parallel>, #tpu.dimension_semantics<arbitrary>], iteration_bounds = array<i64: 1, 1>, scalar_prefetch = 0 : i64, scratch_operands = 1 : i64, tpu.core_type = #tpu.core_type<tc>, window_params = [{transform_indices = @transform_0, window_bounds = array<i64: 8, 2, 128>}, {pipeline_mode = #tpu.pipeline_mode<synchronous>, transform_indices = @transform_1, window_bounds = array<i64: 128, 128>}, {pipeline_mode = #tpu.pipeline_mode<synchronous>, transform_indices = @transform_2, window_bounds = array<i64: 1, 128>}, {pipeline_mode = #tpu.pipeline_mode<synchronous>, transform_indices = @transform_3, window_bounds = array<i64: 128, 128>}, {pipeline_mode = #tpu.pipeline_mode<synchronous>, transform_indices = @transform_4, window_bounds = array<i64: 1, 128>}, {transform_indices = @transform_5, window_bounds = array<i64: 8, 2, 128>}, {transform_indices = @transform_6, window_bounds = array<i64: 8, 2, 128>}]} {
    %c0_i32 = arith.constant 0 : i32
    %0 = arith.cmpi eq, %arg1, %c0_i32 : i32
    %1 = arith.extui %0 : i1 to i32
    %c0_i32_0 = arith.constant 0 : i32
    %2 = arith.cmpi ne, %1, %c0_i32_0 : i32
    scf.if %2 {
      %c0_106 = arith.constant 0 : index
      %c0_107 = arith.constant 0 : index
      %144 = vector.load %arg4[%c0_106, %c0_107] : memref<1x128xf32, #tpu.memory_space<vmem>>, vector<1x128xf32>
      %145 = vector.shape_cast %144 : vector<1x128xf32> to vector<1x128xf32>
      %146 = vector.broadcast %145 : vector<1x128xf32> to vector<2x128xf32>
      %c0_108 = arith.constant 0 : index
      %c0_109 = arith.constant 0 : index
      %147 = vector.load %arg9[%c0_108, %c0_109] : memref<2x128xf32, #tpu.memory_space<vmem>>, vector<2x128xf32>
      tpu.vector_store %arg9[%c0_108, %c0_109], %146 {strides = array<i32>} : memref<2x128xf32, #tpu.memory_space<vmem>>, vector<2x128xf32>,
    } else {
    }
    %c0 = arith.constant 0 : index
    %c0_1 = arith.constant 0 : index
    %3 = vector.load %arg3[%c0, %c0_1] : memref<128x128xf32, #tpu.memory_space<vmem>>, vector<128x128xf32>
    %c0_2 = arith.constant 0 : index
    %c0_3 = arith.constant 0 : index
    %4 = vector.load %arg5[%c0_2, %c0_3] : memref<128x128xf32, #tpu.memory_space<vmem>>, vector<128x128xf32>
    %c0_4 = arith.constant 0 : index
    %c0_5 = arith.constant 0 : index
    %5 = vector.load %arg6[%c0_4, %c0_5] : memref<1x128xf32, #tpu.memory_space<vmem>>, vector<1x128xf32>
    %c0_6 = arith.constant 0 : index
    %c0_7 = arith.constant 0 : index
    %6 = vector.load %arg9[%c0_6, %c0_7] : memref<2x128xf32, #tpu.memory_space<vmem>>, vector<2x128xf32>
    %c0_8 = arith.constant 0 : index
    %c0_9 = arith.constant 0 : index
    %c0_10 = arith.constant 0 : index
    %7 = vector.load %arg2[%c0_8, %c0_9, %c0_10] : memref<8x2x128xf32, #tpu.memory_space<vmem>>, vector<1x2x128xf32>
    %8 = vector.shape_cast %7 : vector<1x2x128xf32> to vector<2x128xf32>
    %cst = arith.constant dense<0.000000e+00> : vector<2x128xf32>
    %9 = tpu.matmul %6, %3, %cst {dimension_numbers = #tpu.dot_dimension_numbers<[1], [0], [0], [1], [0, 0, 1, 1], [], []>} : vector<2x128xf32>, vector<128x128xf32>, vector<2x128xf32> -> vector<2x128xf32>
    %10 = arith.addf %8, %9 : vector<2x128xf32>
    %cst_11 = arith.constant 0.000000e+00 : f32
    %11 = vector.broadcast %cst_11 : f32 to vector<2x128xf32>
    %12 = arith.maximumf %10, %11 : vector<2x128xf32>
    %cst_12 = arith.constant 1.000000e+00 : f32
    %13 = vector.broadcast %cst_12 : f32 to vector<2x128xf32>
    %14 = arith.minimumf %12, %13 : vector<2x128xf32>
    %c0_13 = arith.constant 0 : index
    %c0_14 = arith.constant 0 : index
    %c0_15 = arith.constant 0 : index
    %15 = vector.load %arg7[%c0_13, %c0_14, %c0_15] : memref<8x2x128xf32, #tpu.memory_space<vmem>>, vector<1x2x128xf32>
    %16 = vector.shape_cast %15 : vector<1x2x128xf32> to vector<2x128xf32>
    %17 = vector.shape_cast %14 : vector<2x128xf32> to vector<1x2x128xf32>
    tpu.vector_store %arg7[%c0_13, %c0_14, %c0_15], %17 {strides = array<i32>} : memref<8x2x128xf32, #tpu.memory_space<vmem>>, vector<1x2x128xf32>,
    %cst_16 = arith.constant dense<0.000000e+00> : vector<2x128xf32>
    %18 = tpu.matmul %14, %4, %cst_16 {dimension_numbers = #tpu.dot_dimension_numbers<[1], [0], [0], [1], [0, 0, 1, 1], [], []>} : vector<2x128xf32>, vector<128x128xf32>, vector<2x128xf32> -> vector<2x128xf32>
    %19 = vector.broadcast %5 : vector<1x128xf32> to vector<2x128xf32>
    %20 = arith.addf %18, %19 : vector<2x128xf32>
    %c0_17 = arith.constant 0 : index
    %c0_18 = arith.constant 0 : index
    %c0_19 = arith.constant 0 : index
    %21 = vector.load %arg8[%c0_17, %c0_18, %c0_19] : memref<8x2x128xf32, #tpu.memory_space<vmem>>, vector<1x2x128xf32>
    %22 = vector.shape_cast %21 : vector<1x2x128xf32> to vector<2x128xf32>
    %23 = vector.shape_cast %20 : vector<2x128xf32> to vector<1x2x128xf32>
    tpu.vector_store %arg8[%c0_17, %c0_18, %c0_19], %23 {strides = array<i32>} : memref<8x2x128xf32, #tpu.memory_space<vmem>>, vector<1x2x128xf32>,
    %c1 = arith.constant 1 : index
    %c0_20 = arith.constant 0 : index
    %c0_21 = arith.constant 0 : index
    %24 = vector.load %arg2[%c1, %c0_20, %c0_21] : memref<8x2x128xf32, #tpu.memory_space<vmem>>, vector<1x2x128xf32>
    %25 = vector.shape_cast %24 : vector<1x2x128xf32> to vector<2x128xf32>
    %cst_22 = arith.constant dense<0.000000e+00> : vector<2x128xf32>
    %26 = tpu.matmul %14, %3, %cst_22 {dimension_numbers = #tpu.dot_dimension_numbers<[1], [0], [0], [1], [0, 0, 1, 1], [], []>} : vector<2x128xf32>, vector<128x128xf32>, vector<2x128xf32> -> vector<2x128xf32>
    %27 = arith.addf %25, %26 : vector<2x128xf32>
    %cst_23 = arith.constant 0.000000e+00 : f32
    %28 = vector.broadcast %cst_23 : f32 to vector<2x128xf32>
    %29 = arith.maximumf %27, %28 : vector<2x128xf32>
    %cst_24 = arith.constant 1.000000e+00 : f32
    %30 = vector.broadcast %cst_24 : f32 to vector<2x128xf32>
    %31 = arith.minimumf %29, %30 : vector<2x128xf32>
    %c1_25 = arith.constant 1 : index
    %c0_26 = arith.constant 0 : index
    %c0_27 = arith.constant 0 : index
    %32 = vector.load %arg7[%c1_25, %c0_26, %c0_27] : memref<8x2x128xf32, #tpu.memory_space<vmem>>, vector<1x2x128xf32>
    %33 = vector.shape_cast %32 : vector<1x2x128xf32> to vector<2x128xf32>
    %34 = vector.shape_cast %31 : vector<2x128xf32> to vector<1x2x128xf32>
    tpu.vector_store %arg7[%c1_25, %c0_26, %c0_27], %34 {strides = array<i32>} : memref<8x2x128xf32, #tpu.memory_space<vmem>>, vector<1x2x128xf32>,
    %cst_28 = arith.constant dense<0.000000e+00> : vector<2x128xf32>
    %35 = tpu.matmul %31, %4, %cst_28 {dimension_numbers = #tpu.dot_dimension_numbers<[1], [0], [0], [1], [0, 0, 1, 1], [], []>} : vector<2x128xf32>, vector<128x128xf32>, vector<2x128xf32> -> vector<2x128xf32>
    %36 = vector.broadcast %5 : vector<1x128xf32> to vector<2x128xf32>
    %37 = arith.addf %35, %36 : vector<2x128xf32>
    %c1_29 = arith.constant 1 : index
    %c0_30 = arith.constant 0 : index
    %c0_31 = arith.constant 0 : index
    %38 = vector.load %arg8[%c1_29, %c0_30, %c0_31] : memref<8x2x128xf32, #tpu.memory_space<vmem>>, vector<1x2x128xf32>
    %39 = vector.shape_cast %38 : vector<1x2x128xf32> to vector<2x128xf32>
    %40 = vector.shape_cast %37 : vector<2x128xf32> to vector<1x2x128xf32>
    tpu.vector_store %arg8[%c1_29, %c0_30, %c0_31], %40 {strides = array<i32>} : memref<8x2x128xf32, #tpu.memory_space<vmem>>, vector<1x2x128xf32>,
    %c2 = arith.constant 2 : index
    %c0_32 = arith.constant 0 : index
    %c0_33 = arith.constant 0 : index
    %41 = vector.load %arg2[%c2, %c0_32, %c0_33] : memref<8x2x128xf32, #tpu.memory_space<vmem>>, vector<1x2x128xf32>
    %42 = vector.shape_cast %41 : vector<1x2x128xf32> to vector<2x128xf32>
    %cst_34 = arith.constant dense<0.000000e+00> : vector<2x128xf32>
    %43 = tpu.matmul %31, %3, %cst_34 {dimension_numbers = #tpu.dot_dimension_numbers<[1], [0], [0], [1], [0, 0, 1, 1], [], []>} : vector<2x128xf32>, vector<128x128xf32>, vector<2x128xf32> -> vector<2x128xf32>
    %44 = arith.addf %42, %43 : vector<2x128xf32>
    %cst_35 = arith.constant 0.000000e+00 : f32
    %45 = vector.broadcast %cst_35 : f32 to vector<2x128xf32>
    %46 = arith.maximumf %44, %45 : vector<2x128xf32>
    %cst_36 = arith.constant 1.000000e+00 : f32
    %47 = vector.broadcast %cst_36 : f32 to vector<2x128xf32>
    %48 = arith.minimumf %46, %47 : vector<2x128xf32>
    %c2_37 = arith.constant 2 : index
    %c0_38 = arith.constant 0 : index
    %c0_39 = arith.constant 0 : index
    %49 = vector.load %arg7[%c2_37, %c0_38, %c0_39] : memref<8x2x128xf32, #tpu.memory_space<vmem>>, vector<1x2x128xf32>
    %50 = vector.shape_cast %49 : vector<1x2x128xf32> to vector<2x128xf32>
    %51 = vector.shape_cast %48 : vector<2x128xf32> to vector<1x2x128xf32>
    tpu.vector_store %arg7[%c2_37, %c0_38, %c0_39], %51 {strides = array<i32>} : memref<8x2x128xf32, #tpu.memory_space<vmem>>, vector<1x2x128xf32>,
    %cst_40 = arith.constant dense<0.000000e+00> : vector<2x128xf32>
    %52 = tpu.matmul %48, %4, %cst_40 {dimension_numbers = #tpu.dot_dimension_numbers<[1], [0], [0], [1], [0, 0, 1, 1], [], []>} : vector<2x128xf32>, vector<128x128xf32>, vector<2x128xf32> -> vector<2x128xf32>
    %53 = vector.broadcast %5 : vector<1x128xf32> to vector<2x128xf32>
    %54 = arith.addf %52, %53 : vector<2x128xf32>
    %c2_41 = arith.constant 2 : index
    %c0_42 = arith.constant 0 : index
    %c0_43 = arith.constant 0 : index
    %55 = vector.load %arg8[%c2_41, %c0_42, %c0_43] : memref<8x2x128xf32, #tpu.memory_space<vmem>>, vector<1x2x128xf32>
    %56 = vector.shape_cast %55 : vector<1x2x128xf32> to vector<2x128xf32>
    %57 = vector.shape_cast %54 : vector<2x128xf32> to vector<1x2x128xf32>
    tpu.vector_store %arg8[%c2_41, %c0_42, %c0_43], %57 {strides = array<i32>} : memref<8x2x128xf32, #tpu.memory_space<vmem>>, vector<1x2x128xf32>,
    %c3 = arith.constant 3 : index
    %c0_44 = arith.constant 0 : index
    %c0_45 = arith.constant 0 : index
    %58 = vector.load %arg2[%c3, %c0_44, %c0_45] : memref<8x2x128xf32, #tpu.memory_space<vmem>>, vector<1x2x128xf32>
    %59 = vector.shape_cast %58 : vector<1x2x128xf32> to vector<2x128xf32>
    %cst_46 = arith.constant dense<0.000000e+00> : vector<2x128xf32>
    %60 = tpu.matmul %48, %3, %cst_46 {dimension_numbers = #tpu.dot_dimension_numbers<[1], [0], [0], [1], [0, 0, 1, 1], [], []>} : vector<2x128xf32>, vector<128x128xf32>, vector<2x128xf32> -> vector<2x128xf32>
    %61 = arith.addf %59, %60 : vector<2x128xf32>
    %cst_47 = arith.constant 0.000000e+00 : f32
    %62 = vector.broadcast %cst_47 : f32 to vector<2x128xf32>
    %63 = arith.maximumf %61, %62 : vector<2x128xf32>
    %cst_48 = arith.constant 1.000000e+00 : f32
    %64 = vector.broadcast %cst_48 : f32 to vector<2x128xf32>
    %65 = arith.minimumf %63, %64 : vector<2x128xf32>
    %c3_49 = arith.constant 3 : index
    %c0_50 = arith.constant 0 : index
    %c0_51 = arith.constant 0 : index
    %66 = vector.load %arg7[%c3_49, %c0_50, %c0_51] : memref<8x2x128xf32, #tpu.memory_space<vmem>>, vector<1x2x128xf32>
    %67 = vector.shape_cast %66 : vector<1x2x128xf32> to vector<2x128xf32>
    %68 = vector.shape_cast %65 : vector<2x128xf32> to vector<1x2x128xf32>
    tpu.vector_store %arg7[%c3_49, %c0_50, %c0_51], %68 {strides = array<i32>} : memref<8x2x128xf32, #tpu.memory_space<vmem>>, vector<1x2x128xf32>,
    %cst_52 = arith.constant dense<0.000000e+00> : vector<2x128xf32>
    %69 = tpu.matmul %65, %4, %cst_52 {dimension_numbers = #tpu.dot_dimension_numbers<[1], [0], [0], [1], [0, 0, 1, 1], [], []>} : vector<2x128xf32>, vector<128x128xf32>, vector<2x128xf32> -> vector<2x128xf32>
    %70 = vector.broadcast %5 : vector<1x128xf32> to vector<2x128xf32>
    %71 = arith.addf %69, %70 : vector<2x128xf32>
    %c3_53 = arith.constant 3 : index
    %c0_54 = arith.constant 0 : index
    %c0_55 = arith.constant 0 : index
    %72 = vector.load %arg8[%c3_53, %c0_54, %c0_55] : memref<8x2x128xf32, #tpu.memory_space<vmem>>, vector<1x2x128xf32>
    %73 = vector.shape_cast %72 : vector<1x2x128xf32> to vector<2x128xf32>
    %74 = vector.shape_cast %71 : vector<2x128xf32> to vector<1x2x128xf32>
    tpu.vector_store %arg8[%c3_53, %c0_54, %c0_55], %74 {strides = array<i32>} : memref<8x2x128xf32, #tpu.memory_space<vmem>>, vector<1x2x128xf32>,
    %c4 = arith.constant 4 : index
    %c0_56 = arith.constant 0 : index
    %c0_57 = arith.constant 0 : index
    %75 = vector.load %arg2[%c4, %c0_56, %c0_57] : memref<8x2x128xf32, #tpu.memory_space<vmem>>, vector<1x2x128xf32>
    %76 = vector.shape_cast %75 : vector<1x2x128xf32> to vector<2x128xf32>
    %cst_58 = arith.constant dense<0.000000e+00> : vector<2x128xf32>
    %77 = tpu.matmul %65, %3, %cst_58 {dimension_numbers = #tpu.dot_dimension_numbers<[1], [0], [0], [1], [0, 0, 1, 1], [], []>} : vector<2x128xf32>, vector<128x128xf32>, vector<2x128xf32> -> vector<2x128xf32>
    %78 = arith.addf %76, %77 : vector<2x128xf32>
    %cst_59 = arith.constant 0.000000e+00 : f32
    %79 = vector.broadcast %cst_59 : f32 to vector<2x128xf32>
    %80 = arith.maximumf %78, %79 : vector<2x128xf32>
    %cst_60 = arith.constant 1.000000e+00 : f32
    %81 = vector.broadcast %cst_60 : f32 to vector<2x128xf32>
    %82 = arith.minimumf %80, %81 : vector<2x128xf32>
    %c4_61 = arith.constant 4 : index
    %c0_62 = arith.constant 0 : index
    %c0_63 = arith.constant 0 : index
    %83 = vector.load %arg7[%c4_61, %c0_62, %c0_63] : memref<8x2x128xf32, #tpu.memory_space<vmem>>, vector<1x2x128xf32>
    %84 = vector.shape_cast %83 : vector<1x2x128xf32> to vector<2x128xf32>
    %85 = vector.shape_cast %82 : vector<2x128xf32> to vector<1x2x128xf32>
    tpu.vector_store %arg7[%c4_61, %c0_62, %c0_63], %85 {strides = array<i32>} : memref<8x2x128xf32, #tpu.memory_space<vmem>>, vector<1x2x128xf32>,
    %cst_64 = arith.constant dense<0.000000e+00> : vector<2x128xf32>
    %86 = tpu.matmul %82, %4, %cst_64 {dimension_numbers = #tpu.dot_dimension_numbers<[1], [0], [0], [1], [0, 0, 1, 1], [], []>} : vector<2x128xf32>, vector<128x128xf32>, vector<2x128xf32> -> vector<2x128xf32>
    %87 = vector.broadcast %5 : vector<1x128xf32> to vector<2x128xf32>
    %88 = arith.addf %86, %87 : vector<2x128xf32>
    %c4_65 = arith.constant 4 : index
    %c0_66 = arith.constant 0 : index
    %c0_67 = arith.constant 0 : index
    %89 = vector.load %arg8[%c4_65, %c0_66, %c0_67] : memref<8x2x128xf32, #tpu.memory_space<vmem>>, vector<1x2x128xf32>
    %90 = vector.shape_cast %89 : vector<1x2x128xf32> to vector<2x128xf32>
    %91 = vector.shape_cast %88 : vector<2x128xf32> to vector<1x2x128xf32>
    tpu.vector_store %arg8[%c4_65, %c0_66, %c0_67], %91 {strides = array<i32>} : memref<8x2x128xf32, #tpu.memory_space<vmem>>, vector<1x2x128xf32>,
    %c5 = arith.constant 5 : index
    %c0_68 = arith.constant 0 : index
    %c0_69 = arith.constant 0 : index
    %92 = vector.load %arg2[%c5, %c0_68, %c0_69] : memref<8x2x128xf32, #tpu.memory_space<vmem>>, vector<1x2x128xf32>
    %93 = vector.shape_cast %92 : vector<1x2x128xf32> to vector<2x128xf32>
    %cst_70 = arith.constant dense<0.000000e+00> : vector<2x128xf32>
    %94 = tpu.matmul %82, %3, %cst_70 {dimension_numbers = #tpu.dot_dimension_numbers<[1], [0], [0], [1], [0, 0, 1, 1], [], []>} : vector<2x128xf32>, vector<128x128xf32>, vector<2x128xf32> -> vector<2x128xf32>
    %95 = arith.addf %93, %94 : vector<2x128xf32>
    %cst_71 = arith.constant 0.000000e+00 : f32
    %96 = vector.broadcast %cst_71 : f32 to vector<2x128xf32>
    %97 = arith.maximumf %95, %96 : vector<2x128xf32>
    %cst_72 = arith.constant 1.000000e+00 : f32
    %98 = vector.broadcast %cst_72 : f32 to vector<2x128xf32>
    %99 = arith.minimumf %97, %98 : vector<2x128xf32>
    %c5_73 = arith.constant 5 : index
    %c0_74 = arith.constant 0 : index
    %c0_75 = arith.constant 0 : index
    %100 = vector.load %arg7[%c5_73, %c0_74, %c0_75] : memref<8x2x128xf32, #tpu.memory_space<vmem>>, vector<1x2x128xf32>
    %101 = vector.shape_cast %100 : vector<1x2x128xf32> to vector<2x128xf32>
    %102 = vector.shape_cast %99 : vector<2x128xf32> to vector<1x2x128xf32>
    tpu.vector_store %arg7[%c5_73, %c0_74, %c0_75], %102 {strides = array<i32>} : memref<8x2x128xf32, #tpu.memory_space<vmem>>, vector<1x2x128xf32>,
    %cst_76 = arith.constant dense<0.000000e+00> : vector<2x128xf32>
    %103 = tpu.matmul %99, %4, %cst_76 {dimension_numbers = #tpu.dot_dimension_numbers<[1], [0], [0], [1], [0, 0, 1, 1], [], []>} : vector<2x128xf32>, vector<128x128xf32>, vector<2x128xf32> -> vector<2x128xf32>
    %104 = vector.broadcast %5 : vector<1x128xf32> to vector<2x128xf32>
    %105 = arith.addf %103, %104 : vector<2x128xf32>
    %c5_77 = arith.constant 5 : index
    %c0_78 = arith.constant 0 : index
    %c0_79 = arith.constant 0 : index
    %106 = vector.load %arg8[%c5_77, %c0_78, %c0_79] : memref<8x2x128xf32, #tpu.memory_space<vmem>>, vector<1x2x128xf32>
    %107 = vector.shape_cast %106 : vector<1x2x128xf32> to vector<2x128xf32>
    %108 = vector.shape_cast %105 : vector<2x128xf32> to vector<1x2x128xf32>
    tpu.vector_store %arg8[%c5_77, %c0_78, %c0_79], %108 {strides = array<i32>} : memref<8x2x128xf32, #tpu.memory_space<vmem>>, vector<1x2x128xf32>,
    %c6 = arith.constant 6 : index
    %c0_80 = arith.constant 0 : index
    %c0_81 = arith.constant 0 : index
    %109 = vector.load %arg2[%c6, %c0_80, %c0_81] : memref<8x2x128xf32, #tpu.memory_space<vmem>>, vector<1x2x128xf32>
    %110 = vector.shape_cast %109 : vector<1x2x128xf32> to vector<2x128xf32>
    %cst_82 = arith.constant dense<0.000000e+00> : vector<2x128xf32>
    %111 = tpu.matmul %99, %3, %cst_82 {dimension_numbers = #tpu.dot_dimension_numbers<[1], [0], [0], [1], [0, 0, 1, 1], [], []>} : vector<2x128xf32>, vector<128x128xf32>, vector<2x128xf32> -> vector<2x128xf32>
    %112 = arith.addf %110, %111 : vector<2x128xf32>
    %cst_83 = arith.constant 0.000000e+00 : f32
    %113 = vector.broadcast %cst_83 : f32 to vector<2x128xf32>
    %114 = arith.maximumf %112, %113 : vector<2x128xf32>
    %cst_84 = arith.constant 1.000000e+00 : f32
    %115 = vector.broadcast %cst_84 : f32 to vector<2x128xf32>
    %116 = arith.minimumf %114, %115 : vector<2x128xf32>
    %c6_85 = arith.constant 6 : index
    %c0_86 = arith.constant 0 : index
    %c0_87 = arith.constant 0 : index
    %117 = vector.load %arg7[%c6_85, %c0_86, %c0_87] : memref<8x2x128xf32, #tpu.memory_space<vmem>>, vector<1x2x128xf32>
    %118 = vector.shape_cast %117 : vector<1x2x128xf32> to vector<2x128xf32>
    %119 = vector.shape_cast %116 : vector<2x128xf32> to vector<1x2x128xf32>
    tpu.vector_store %arg7[%c6_85, %c0_86, %c0_87], %119 {strides = array<i32>} : memref<8x2x128xf32, #tpu.memory_space<vmem>>, vector<1x2x128xf32>,
    %cst_88 = arith.constant dense<0.000000e+00> : vector<2x128xf32>
    %120 = tpu.matmul %116, %4, %cst_88 {dimension_numbers = #tpu.dot_dimension_numbers<[1], [0], [0], [1], [0, 0, 1, 1], [], []>} : vector<2x128xf32>, vector<128x128xf32>, vector<2x128xf32> -> vector<2x128xf32>
    %121 = vector.broadcast %5 : vector<1x128xf32> to vector<2x128xf32>
    %122 = arith.addf %120, %121 : vector<2x128xf32>
    %c6_89 = arith.constant 6 : index
    %c0_90 = arith.constant 0 : index
    %c0_91 = arith.constant 0 : index
    %123 = vector.load %arg8[%c6_89, %c0_90, %c0_91] : memref<8x2x128xf32, #tpu.memory_space<vmem>>, vector<1x2x128xf32>
    %124 = vector.shape_cast %123 : vector<1x2x128xf32> to vector<2x128xf32>
    %125 = vector.shape_cast %122 : vector<2x128xf32> to vector<1x2x128xf32>
    tpu.vector_store %arg8[%c6_89, %c0_90, %c0_91], %125 {strides = array<i32>} : memref<8x2x128xf32, #tpu.memory_space<vmem>>, vector<1x2x128xf32>,
    %c7 = arith.constant 7 : index
    %c0_92 = arith.constant 0 : index
    %c0_93 = arith.constant 0 : index
    %126 = vector.load %arg2[%c7, %c0_92, %c0_93] : memref<8x2x128xf32, #tpu.memory_space<vmem>>, vector<1x2x128xf32>
    %127 = vector.shape_cast %126 : vector<1x2x128xf32> to vector<2x128xf32>
    %cst_94 = arith.constant dense<0.000000e+00> : vector<2x128xf32>
    %128 = tpu.matmul %116, %3, %cst_94 {dimension_numbers = #tpu.dot_dimension_numbers<[1], [0], [0], [1], [0, 0, 1, 1], [], []>} : vector<2x128xf32>, vector<128x128xf32>, vector<2x128xf32> -> vector<2x128xf32>
    %129 = arith.addf %127, %128 : vector<2x128xf32>
    %cst_95 = arith.constant 0.000000e+00 : f32
    %130 = vector.broadcast %cst_95 : f32 to vector<2x128xf32>
    %131 = arith.maximumf %129, %130 : vector<2x128xf32>
    %cst_96 = arith.constant 1.000000e+00 : f32
    %132 = vector.broadcast %cst_96 : f32 to vector<2x128xf32>
    %133 = arith.minimumf %131, %132 : vector<2x128xf32>
    %c7_97 = arith.constant 7 : index
    %c0_98 = arith.constant 0 : index
    %c0_99 = arith.constant 0 : index
    %134 = vector.load %arg7[%c7_97, %c0_98, %c0_99] : memref<8x2x128xf32, #tpu.memory_space<vmem>>, vector<1x2x128xf32>
    %135 = vector.shape_cast %134 : vector<1x2x128xf32> to vector<2x128xf32>
    %136 = vector.shape_cast %133 : vector<2x128xf32> to vector<1x2x128xf32>
    tpu.vector_store %arg7[%c7_97, %c0_98, %c0_99], %136 {strides = array<i32>} : memref<8x2x128xf32, #tpu.memory_space<vmem>>, vector<1x2x128xf32>,
    %cst_100 = arith.constant dense<0.000000e+00> : vector<2x128xf32>
    %137 = tpu.matmul %133, %4, %cst_100 {dimension_numbers = #tpu.dot_dimension_numbers<[1], [0], [0], [1], [0, 0, 1, 1], [], []>} : vector<2x128xf32>, vector<128x128xf32>, vector<2x128xf32> -> vector<2x128xf32>
    %138 = vector.broadcast %5 : vector<1x128xf32> to vector<2x128xf32>
    %139 = arith.addf %137, %138 : vector<2x128xf32>
    %c7_101 = arith.constant 7 : index
    %c0_102 = arith.constant 0 : index
    %c0_103 = arith.constant 0 : index
    %140 = vector.load %arg8[%c7_101, %c0_102, %c0_103] : memref<8x2x128xf32, #tpu.memory_space<vmem>>, vector<1x2x128xf32>
    %141 = vector.shape_cast %140 : vector<1x2x128xf32> to vector<2x128xf32>
    %142 = vector.shape_cast %139 : vector<2x128xf32> to vector<1x2x128xf32>
    tpu.vector_store %arg8[%c7_101, %c0_102, %c0_103], %142 {strides = array<i32>} : memref<8x2x128xf32, #tpu.memory_space<vmem>>, vector<1x2x128xf32>,
    %c0_104 = arith.constant 0 : index
    %c0_105 = arith.constant 0 : index
    %143 = vector.load %arg9[%c0_104, %c0_105] : memref<2x128xf32, #tpu.memory_space<vmem>>, vector<2x128xf32>
    tpu.vector_store %arg9[%c0_104, %c0_105], %133 {strides = array<i32>} : memref<2x128xf32, #tpu.memory_space<vmem>>, vector<2x128xf32>,
    return
  }
  func.func @transform_0(%arg0: i32, %arg1: i32) -> (i32, i32, i32) {
    %c0_i32 = arith.constant 0 : i32
    %c0_i32_0 = arith.constant 0 : i32
    return %arg1, %arg0, %c0_i32 : i32, i32, i32
  }
  func.func @transform_1(%arg0: i32, %arg1: i32) -> (i32, i32) {
    %c0_i32 = arith.constant 0 : i32
    %c0_i32_0 = arith.constant 0 : i32
    %c0_i32_1 = arith.constant 0 : i32
    return %c0_i32, %c0_i32_0 : i32, i32
  }
  func.func @transform_2(%arg0: i32, %arg1: i32) -> (i32, i32) {
    %c0_i32 = arith.constant 0 : i32
    %c0_i32_0 = arith.constant 0 : i32
    %c0_i32_1 = arith.constant 0 : i32
    return %c0_i32, %c0_i32_0 : i32, i32
  }
  func.func @transform_3(%arg0: i32, %arg1: i32) -> (i32, i32) {
    %c0_i32 = arith.constant 0 : i32
    %c0_i32_0 = arith.constant 0 : i32
    %c0_i32_1 = arith.constant 0 : i32
    return %c0_i32, %c0_i32_0 : i32, i32
  }
  func.func @transform_4(%arg0: i32, %arg1: i32) -> (i32, i32) {
    %c0_i32 = arith.constant 0 : i32
    %c0_i32_0 = arith.constant 0 : i32
    %c0_i32_1 = arith.constant 0 : i32
    return %c0_i32, %c0_i32_0 : i32, i32
  }
  func.func @transform_5(%arg0: i32, %arg1: i32) -> (i32, i32, i32) {
    %c0_i32 = arith.constant 0 : i32
    %c0_i32_0 = arith.constant 0 : i32
    return %arg1, %arg0, %c0_i32 : i32, i32, i32
  }
  func.func @transform_6(%arg0: i32, %arg1: i32) -> (i32, i32, i32) {
    %c0_i32 = arith.constant 0 : i32
    %c0_i32_0 = arith.constant 0 : i32
    return %arg1, %arg0, %c0_i32 : i32, i32, i32
  }
}

module attributes {stable_mosaic.version = 11 : i64} {
  func.func @_dense_kernel(%arg0: i32, %arg1: memref<16x16xf32, #tpu.memory_space<vmem>>, %arg2: memref<16x128xf32, #tpu.memory_space<vmem>>, %arg3: memref<1x128xf32, #tpu.memory_space<vmem>>, %arg4: memref<16x128xf32, #tpu.memory_space<vmem>>) attributes {dimension_semantics = [#tpu.dimension_semantics<parallel>], iteration_bounds = array<i64: 1>, scalar_prefetch = 0 : i64, scratch_operands = 0 : i64, tpu.core_type = #tpu.core_type<tc>, window_params = [{transform_indices = @transform_0, window_bounds = array<i64: 16, 16>}, {pipeline_mode = #tpu.pipeline_mode<synchronous>, transform_indices = @transform_1, window_bounds = array<i64: 16, 128>}, {pipeline_mode = #tpu.pipeline_mode<synchronous>, transform_indices = @transform_2, window_bounds = array<i64: 1, 128>}, {transform_indices = @transform_3, window_bounds = array<i64: 16, 128>}]} {
    %c0 = arith.constant 0 : index
    %c0_0 = arith.constant 0 : index
    %0 = vector.load %arg1[%c0, %c0_0] : memref<16x16xf32, #tpu.memory_space<vmem>>, vector<16x16xf32>
    %c0_1 = arith.constant 0 : index
    %c0_2 = arith.constant 0 : index
    %1 = vector.load %arg2[%c0_1, %c0_2] : memref<16x128xf32, #tpu.memory_space<vmem>>, vector<16x128xf32>
    %cst = arith.constant dense<0.000000e+00> : vector<16x128xf32>
    %2 = tpu.matmul %0, %1, %cst {dimension_numbers = #tpu.dot_dimension_numbers<[1], [0], [0], [1], [0, 0, 1, 1], [], []>} : vector<16x16xf32>, vector<16x128xf32>, vector<16x128xf32> -> vector<16x128xf32>
    %c0_3 = arith.constant 0 : index
    %c0_4 = arith.constant 0 : index
    %3 = vector.load %arg3[%c0_3, %c0_4] : memref<1x128xf32, #tpu.memory_space<vmem>>, vector<1x128xf32>
    %4 = vector.broadcast %3 : vector<1x128xf32> to vector<16x128xf32>
    %5 = arith.addf %2, %4 : vector<16x128xf32>
    %c0_5 = arith.constant 0 : index
    %c0_6 = arith.constant 0 : index
    %6 = vector.load %arg4[%c0_5, %c0_6] : memref<16x128xf32, #tpu.memory_space<vmem>>, vector<16x128xf32>
    tpu.vector_store %arg4[%c0_5, %c0_6], %5 {strides = array<i32>} : memref<16x128xf32, #tpu.memory_space<vmem>>, vector<16x128xf32>,
    return
  }
  func.func @transform_0(%arg0: i32) -> (i32, i32) {
    %c0_i32 = arith.constant 0 : i32
    %c0_i32_0 = arith.constant 0 : i32
    return %arg0, %c0_i32 : i32, i32
  }
  func.func @transform_1(%arg0: i32) -> (i32, i32) {
    %c0_i32 = arith.constant 0 : i32
    %c0_i32_0 = arith.constant 0 : i32
    %c0_i32_1 = arith.constant 0 : i32
    return %c0_i32, %c0_i32_0 : i32, i32
  }
  func.func @transform_2(%arg0: i32) -> (i32, i32) {
    %c0_i32 = arith.constant 0 : i32
    %c0_i32_0 = arith.constant 0 : i32
    %c0_i32_1 = arith.constant 0 : i32
    return %c0_i32, %c0_i32_0 : i32, i32
  }
  func.func @transform_3(%arg0: i32) -> (i32, i32) {
    %c0_i32 = arith.constant 0 : i32
    %c0_i32_0 = arith.constant 0 : i32
    return %arg0, %c0_i32 : i32, i32
  }
}

</mosaic_0001>

<llo_original>
// kernel: simple_rnn_forward.2
$region0: #{simple_rnn_forward.2}
  #allocation0 [shape = 'u32[]', space=smem, size = 0x4, offset = 0x4, fixed_abs, tag = 'smem constant byte address 0x4 - core index']
  #allocation1 [shape = 'u32[72,128]{1,0:T(1,128)}', space=vmem, size = 0x9000, scoped, tag = 'internal scratch']
  %s0 = inlined_call_operand.vmem [shape: f32[16,16], index: 0, kind: input, shape index: {}]
  %s1 = inlined_call_operand.vmem [shape: f32[16,128], index: 1, kind: input, shape index: {}]
  %s2 = inlined_call_operand.vmem [shape: f32[1,128], index: 2, kind: input, shape index: {}]
  %s3 = inlined_call_operand.vmem [shape: f32[16,128], index: 3, kind: output, shape index: {}]
  %s4 = sld [smem:[#allocation0]]
  $region22: #{simple_rnn_forward.2} parent=0
    _
  %s6 = ssub.s32 1, %s4
  %s7 = scalar_select 0, %s6, %s4
  // Predicated region
  $region2: #{simple_rnn_forward.2} parent=0 // pred_check
    _
  $region3: #{simple_rnn_forward.2} parent=0 // pred_check_branch
    %9 = sbr.rel (0) target = $region5
  $region4: #{simple_rnn_forward.2} parent=0 // pred_region
    _
  $region5: #{simple_rnn_forward.2} parent=0 // pred_fallthru
    _
  // Predicated region
  $region6: #{simple_rnn_forward.2} parent=0 // pred_check
    _
  $region7: #{simple_rnn_forward.2} parent=0 // pred_check_branch
    %11 = sbr.rel (0) target = $region9
  $region8: #{simple_rnn_forward.2} parent=0 // pred_region
    _
  $region9: #{simple_rnn_forward.2} parent=0 // pred_fallthru
    _
  // Predicated region
  $region10: #{simple_rnn_forward.2} parent=0 // pred_check
    _
  $region11: #{simple_rnn_forward.2} parent=0 // pred_check_branch
    %13 = sbr.rel (0) target = $region13
  $region12: #{simple_rnn_forward.2} parent=0 // pred_region
    _
  $region13: #{simple_rnn_forward.2} parent=0 // pred_fallthru
    _
  %v14 = vld [vmem:[%s0] sm:$0xff]
  %v15 = vld [vmem:[%s0 + $0x8] sm:$0xff]
  %v16 = vld [vmem:[%s1] sm:$0xff]
  %v17 = vld [vmem:[%s1 + $0x8] sm:$0xff]
  %v18 = vld [vmem:[%s2] sm:$0x1]
  %v20 = vperm.slane %v18, 0
  %vm22 = vcmask 130048
  %v24 = vsel %vm22, %v14, 0
  %v27 = vsel %vm22, %v15, 0
  %29 = vmatpush.msra.mxu0 0.0
  %30 = vmatpush.msra.mxu0 0.0
  %31 = vmatpush.msra.mxu0 0.0
  %32 = vmatpush.msra.mxu0 0.0
  %33 = vmatpush.msra.mxu0 0.0
  %34 = vmatpush.msra.mxu0 0.0
  %35 = vmatpush.msra.mxu0 0.0
  %36 = vmatpush.msra.mxu0 0.0
  %37 = vmatpush.msra.mxu0 0.0
  %38 = vmatpush.msra.mxu0 0.0
  %39 = vmatpush.msra.mxu0 0.0
  %40 = vmatpush.msra.mxu0 0.0
  %41 = vmatpush.msra.mxu0 0.0
  %42 = vmatpush.msra.mxu0 0.0
  %43 = vmatpush.msra.mxu0 %v17
  %44 = vmatpush.msra.mxu0 %v16
  %45 = vmatmul.f32.gmra.mxu0 %v24
  %v46 = vpop.f32.mrf.mxu0
  %v47 = vadd.f32 %v20, %v46
  %48 = vmatmul.f32.gmra.mxu0 %v27
  %v49 = vpop.f32.mrf.mxu0
  %v50 = vadd.f32 %v20, %v49
  %51 = vdwg.mxu0
  %52 = vst [vmem:[%s3] sm:$0xff] %v47
  %53 = vst [vmem:[%s3 + $0x8] sm:$0xff] %v50
  // Predicated region
  $region14: #{simple_rnn_forward.2} parent=0 // pred_check
    _
  $region15: #{simple_rnn_forward.2} parent=0 // pred_check_branch
    %55 = sbr.rel (0) target = $region17
  $region16: #{simple_rnn_forward.2} parent=0 // pred_region
    _
  $region17: #{simple_rnn_forward.2} parent=0 // pred_fallthru
    _
  // Predicated region
  $region18: #{simple_rnn_forward.2} parent=0 // pred_check
    _
  $region19: #{simple_rnn_forward.2} parent=0 // pred_check_branch
    %57 = sbr.rel (0) target = $region21
  $region20: #{simple_rnn_forward.2} parent=0 // pred_region
    _
  $region21: #{simple_rnn_forward.2} parent=0 // pred_fallthru
    _

// kernel: simple_rnn_forward.3
$region0: #{simple_rnn_forward.3}
  #allocation0 [shape = 'u32[]', space=smem, size = 0x4, offset = 0x4, fixed_abs, tag = 'smem constant byte address 0x4 - core index']
  #allocation1 [shape = 'u32[72,128]{1,0:T(1,128)}', space=vmem, size = 0x9000, scoped, tag = 'internal scratch']
  #allocation2 [shape = 'f32[2,128]{1,0:T(2,128)}', space=vmem, size = 0x400, scoped, tag = 'scratch operand']
  %s0 = inlined_call_operand.vmem [shape: f32[8,2,128], index: 0, kind: input, shape index: {}]
  %s1 = inlined_call_operand.vmem [shape: f32[128,128], index: 1, kind: input, shape index: {}]
  %s2 = inlined_call_operand.vmem [shape: f32[1,128], index: 2, kind: input, shape index: {}]
  %s3 = inlined_call_operand.vmem [shape: f32[128,128], index: 3, kind: input, shape index: {}]
  %s4 = inlined_call_operand.vmem [shape: f32[1,128], index: 4, kind: input, shape index: {}]
  %s5 = inlined_call_operand.vmem [shape: f32[8,2,128], index: 5, kind: output, shape index: {0}]
  %s6 = inlined_call_operand.vmem [shape: f32[8,2,128], index: 6, kind: output, shape index: {1}]
  %7 = xla_tuple %s5, %s6
  %s8 = sld [smem:[#allocation0]]
  $region42: #{simple_rnn_forward.3} parent=0
    _
  %s10 = ssub.s32 1, %s8
  %s11 = scalar_select 0, %s10, %s8
  // Predicated region
  $region2: #{simple_rnn_forward.3} parent=0 // pred_check
    _
  $region3: #{simple_rnn_forward.3} parent=0 // pred_check_branch
    %13 = sbr.rel (0) target = $region5
  $region4: #{simple_rnn_forward.3} parent=0 // pred_region
    _
  $region5: #{simple_rnn_forward.3} parent=0 // pred_fallthru
    _
  // Predicated region
  $region6: #{simple_rnn_forward.3} parent=0 // pred_check
    _
  $region7: #{simple_rnn_forward.3} parent=0 // pred_check_branch
    %15 = sbr.rel (0) target = $region9
  $region8: #{simple_rnn_forward.3} parent=0 // pred_region
    _
  $region9: #{simple_rnn_forward.3} parent=0 // pred_fallthru
    _
  // Predicated region
  $region10: #{simple_rnn_forward.3} parent=0 // pred_check
    _
  $region11: #{simple_rnn_forward.3} parent=0 // pred_check_branch
    %17 = sbr.rel (0) target = $region13
  $region12: #{simple_rnn_forward.3} parent=0 // pred_region
    _
  $region13: #{simple_rnn_forward.3} parent=0 // pred_fallthru
    _
  // Predicated region
  $region14: #{simple_rnn_forward.3} parent=0 // pred_check
    _
  $region15: #{simple_rnn_forward.3} parent=0 // pred_check_branch
    %19 = sbr.rel (0) target = $region17
  $region16: #{simple_rnn_forward.3} parent=0 // pred_region
    _
  $region17: #{simple_rnn_forward.3} parent=0 // pred_fallthru
    _
  // Predicated region
  $region18: #{simple_rnn_forward.3} parent=0 // pred_check
    _
  $region19: #{simple_rnn_forward.3} parent=0 // pred_check_branch
    %21 = sbr.rel (0) target = $region21
  $region20: #{simple_rnn_forward.3} parent=0 // pred_region
    _
  $region21: #{simple_rnn_forward.3} parent=0 // pred_fallthru
    _
  %p22 = scmp.eq.s32.totalorder 0, 0
  // Predicated region
  $region22: #{simple_rnn_forward.3} parent=0 // pred_check
    %p23 = pneg %p22
  $region23: #{simple_rnn_forward.3} parent=0 // pred_check_branch
    %25 = sbr.rel (%p23) target = $region25
  $region24: #{simple_rnn_forward.3} parent=0 // pred_region
    %v26 = vld [vmem:[%s2] sm:$0x1]
    %v28 = vperm.slane %v26, 0
    %30 = vst [vmem:[#allocation2] sm:$0x3] %v28
  $region25: #{simple_rnn_forward.3} parent=0 // pred_fallthru
    _
  %v31 = vld [vmem:[%s1] sm:$0xff]
  %v32 = vld [vmem:[%s1 + $0x8] sm:$0xff]
  %v33 = vld [vmem:[%s1 + $0x10] sm:$0xff]
  %v34 = vld [vmem:[%s1 + $0x18] sm:$0xff]
  %v35 = vld [vmem:[%s1 + $0x20] sm:$0xff]
  %v36 = vld [vmem:[%s1 + $0x28] sm:$0xff]
  %v37 = vld [vmem:[%s1 + $0x30] sm:$0xff]
  %v38 = vld [vmem:[%s1 + $0x38] sm:$0xff]
  %v39 = vld [vmem:[%s1 + $0x40] sm:$0xff]
  %v40 = vld [vmem:[%s1 + $0x48] sm:$0xff]
  %v41 = vld [vmem:[%s1 + $0x50] sm:$0xff]
  %v42 = vld [vmem:[%s1 + $0x58] sm:$0xff]
  %v43 = vld [vmem:[%s1 + $0x60] sm:$0xff]
  %v44 = vld [vmem:[%s1 + $0x68] sm:$0xff]
  %v45 = vld [vmem:[%s1 + $0x70] sm:$0xff]
  %v46 = vld [vmem:[%s1 + $0x78] sm:$0xff]
  %v47 = vld [vmem:[%s3] sm:$0xff]
  %v48 = vld [vmem:[%s3 + $0x8] sm:$0xff]
  %v49 = vld [vmem:[%s3 + $0x10] sm:$0xff]
  %v50 = vld [vmem:[%s3 + $0x18] sm:$0xff]
  %v51 = vld [vmem:[%s3 + $0x20] sm:$0xff]
  %v52 = vld [vmem:[%s3 + $0x28] sm:$0xff]
  %v53 = vld [vmem:[%s3 + $0x30] sm:$0xff]
  %v54 = vld [vmem:[%s3 + $0x38] sm:$0xff]
  %v55 = vld [vmem:[%s3 + $0x40] sm:$0xff]
  %v56 = vld [vmem:[%s3 + $0x48] sm:$0xff]
  %v57 = vld [vmem:[%s3 + $0x50] sm:$0xff]
  %v58 = vld [vmem:[%s3 + $0x58] sm:$0xff]
  %v59 = vld [vmem:[%s3 + $0x60] sm:$0xff]
  %v60 = vld [vmem:[%s3 + $0x68] sm:$0xff]
  %v61 = vld [vmem:[%s3 + $0x70] sm:$0xff]
  %v62 = vld [vmem:[%s3 + $0x78] sm:$0xff]
  %v63 = vld [vmem:[%s4] sm:$0x1]
  %v64 = vld [vmem:[#allocation2] sm:$0x3]
  %v65 = vld [vmem:[%s0] sm:$0x3]
  %66 = vmatpush.msra.mxu0 %v46
  %67 = vmatpush.msra.mxu0 %v45
  %68 = vmatpush.msra.mxu0 %v44
  %69 = vmatpush.msra.mxu0 %v43
  %70 = vmatpush.msra.mxu0 %v42
  %71 = vmatpush.msra.mxu0 %v41
  %72 = vmatpush.msra.mxu0 %v40
  %73 = vmatpush.msra.mxu0 %v39
  %74 = vmatpush.msra.mxu0 %v38
  %75 = vmatpush.msra.mxu0 %v37
  %76 = vmatpush.msra.mxu0 %v36
  %77 = vmatpush.msra.mxu0 %v35
  %78 = vmatpush.msra.mxu0 %v34
  %79 = vmatpush.msra.mxu0 %v33
  %80 = vmatpush.msra.mxu0 %v32
  %81 = vmatpush.msra.mxu0 %v31
  %82 = vmatmul.f32.gmra.mxu0 %v64
  %v83 = vpop.f32.mrf.mxu0
  %v84 = vadd.f32 0.0, %v83
  %85 = vdwg.mxu0
  %v86 = vadd.f32 %v65, %v84
  %v87 = vmax.f32 %v86, 0.0
  %v88 = vmin.f32 %v87, 1.0
  %89 = vst [vmem:[%s5] sm:$0x3] %v88
  %v91 = vperm.slane %v63, 0
  %93 = vmatpush.msra.mxu0 %v62
  %94 = vmatpush.msra.mxu0 %v61
  %95 = vmatpush.msra.mxu0 %v60
  %96 = vmatpush.msra.mxu0 %v59
  %97 = vmatpush.msra.mxu0 %v58
  %98 = vmatpush.msra.mxu0 %v57
  %99 = vmatpush.msra.mxu0 %v56
  %100 = vmatpush.msra.mxu0 %v55
  %101 = vmatpush.msra.mxu0 %v54
  %102 = vmatpush.msra.mxu0 %v53
  %103 = vmatpush.msra.mxu0 %v52
  %104 = vmatpush.msra.mxu0 %v51
  %105 = vmatpush.msra.mxu0 %v50
  %106 = vmatpush.msra.mxu0 %v49
  %107 = vmatpush.msra.mxu0 %v48
  %108 = vmatpush.msra.mxu0 %v47
  %109 = vmatmul.f32.gmra.mxu0 %v88
  %v110 = vpop.f32.mrf.mxu0
  %v111 = vadd.f32 %v91, %v110
  %112 = vdwg.mxu0
  %113 = vst [vmem:[%s6] sm:$0x3] %v111
  %s114 = scalar_lea.vmem %s0, 2
  %v115 = vld [vmem:[%s114] sm:$0x3]
  %116 = vmatpush.msra.mxu0 %v46
  %117 = vmatpush.msra.mxu0 %v45
  %118 = vmatpush.msra.mxu0 %v44
  %119 = vmatpush.msra.mxu0 %v43
  %120 = vmatpush.msra.mxu0 %v42
  %121 = vmatpush.msra.mxu0 %v41
  %122 = vmatpush.msra.mxu0 %v40
  %123 = vmatpush.msra.mxu0 %v39
  %124 = vmatpush.msra.mxu0 %v38
  %125 = vmatpush.msra.mxu0 %v37
  %126 = vmatpush.msra.mxu0 %v36
  %127 = vmatpush.msra.mxu0 %v35
  %128 = vmatpush.msra.mxu0 %v34
  %129 = vmatpush.msra.mxu0 %v33
  %130 = vmatpush.msra.mxu0 %v32
  %131 = vmatpush.msra.mxu0 %v31
  %132 = vmatmul.f32.gmra.mxu0 %v88
  %v133 = vpop.f32.mrf.mxu0
  %v134 = vadd.f32 0.0, %v133
  %135 = vdwg.mxu0
  %v136 = vadd.f32 %v115, %v134
  %v137 = vmax.f32 %v136, 0.0
  %v138 = vmin.f32 %v137, 1.0
  %s139 = scalar_lea.vmem %s5, 2
  %140 = vst [vmem:[%s139] sm:$0x3] %v138
  %141 = vmatpush.msra.mxu0 %v62
  %142 = vmatpush.msra.mxu0 %v61
  %143 = vmatpush.msra.mxu0 %v60
  %144 = vmatpush.msra.mxu0 %v59
  %145 = vmatpush.msra.mxu0 %v58
  %146 = vmatpush.msra.mxu0 %v57
  %147 = vmatpush.msra.mxu0 %v56
  %148 = vmatpush.msra.mxu0 %v55
  %149 = vmatpush.msra.mxu0 %v54
  %150 = vmatpush.msra.mxu0 %v53
  %151 = vmatpush.msra.mxu0 %v52
  %152 = vmatpush.msra.mxu0 %v51
  %153 = vmatpush.msra.mxu0 %v50
  %154 = vmatpush.msra.mxu0 %v49
  %155 = vmatpush.msra.mxu0 %v48
  %156 = vmatpush.msra.mxu0 %v47
  %157 = vmatmul.f32.gmra.mxu0 %v138
  %v158 = vpop.f32.mrf.mxu0
  %v159 = vadd.f32 %v91, %v158
  %160 = vdwg.mxu0
  %s161 = scalar_lea.vmem %s6, 2
  %162 = vst [vmem:[%s161] sm:$0x3] %v159
  %s163 = scalar_lea.vmem %s0, 4
  %v164 = vld [vmem:[%s163] sm:$0x3]
  %165 = vmatpush.msra.mxu0 %v46
  %166 = vmatpush.msra.mxu0 %v45
  %167 = vmatpush.msra.mxu0 %v44
  %168 = vmatpush.msra.mxu0 %v43
  %169 = vmatpush.msra.mxu0 %v42
  %170 = vmatpush.msra.mxu0 %v41
  %171 = vmatpush.msra.mxu0 %v40
  %172 = vmatpush.msra.mxu0 %v39
  %173 = vmatpush.msra.mxu0 %v38
  %174 = vmatpush.msra.mxu0 %v37
  %175 = vmatpush.msra.mxu0 %v36
  %176 = vmatpush.msra.mxu0 %v35
  %177 = vmatpush.msra.mxu0 %v34
  %178 = vmatpush.msra.mxu0 %v33
  %179 = vmatpush.msra.mxu0 %v32
  %180 = vmatpush.msra.mxu0 %v31
  %181 = vmatmul.f32.gmra.mxu0 %v138
  %v182 = vpop.f32.mrf.mxu0
  %v183 = vadd.f32 0.0, %v182
  %184 = vdwg.mxu0
  %v185 = vadd.f32 %v164, %v183
  %v186 = vmax.f32 %v185, 0.0
  %v187 = vmin.f32 %v186, 1.0
  %s188 = scalar_lea.vmem %s5, 4
  %189 = vst [vmem:[%s188] sm:$0x3] %v187
  %190 = vmatpush.msra.mxu0 %v62
  %191 = vmatpush.msra.mxu0 %v61
  %192 = vmatpush.msra.mxu0 %v60
  %193 = vmatpush.msra.mxu0 %v59
  %194 = vmatpush.msra.mxu0 %v58
  %195 = vmatpush.msra.mxu0 %v57
  %196 = vmatpush.msra.mxu0 %v56
  %197 = vmatpush.msra.mxu0 %v55
  %198 = vmatpush.msra.mxu0 %v54
  %199 = vmatpush.msra.mxu0 %v53
  %200 = vmatpush.msra.mxu0 %v52
  %201 = vmatpush.msra.mxu0 %v51
  %202 = vmatpush.msra.mxu0 %v50
  %203 = vmatpush.msra.mxu0 %v49
  %204 = vmatpush.msra.mxu0 %v48
  %205 = vmatpush.msra.mxu0 %v47
  %206 = vmatmul.f32.gmra.mxu0 %v187
  %v207 = vpop.f32.mrf.mxu0
  %v208 = vadd.f32 %v91, %v207
  %209 = vdwg.mxu0
  %s210 = scalar_lea.vmem %s6, 4
  %211 = vst [vmem:[%s210] sm:$0x3] %v208
  %s212 = scalar_lea.vmem %s0, 6
  %v213 = vld [vmem:[%s212] sm:$0x3]
  %214 = vmatpush.msra.mxu0 %v46
  %215 = vmatpush.msra.mxu0 %v45
  %216 = vmatpush.msra.mxu0 %v44
  %217 = vmatpush.msra.mxu0 %v43
  %218 = vmatpush.msra.mxu0 %v42
  %219 = vmatpush.msra.mxu0 %v41
  %220 = vmatpush.msra.mxu0 %v40
  %221 = vmatpush.msra.mxu0 %v39
  %222 = vmatpush.msra.mxu0 %v38
  %223 = vmatpush.msra.mxu0 %v37
  %224 = vmatpush.msra.mxu0 %v36
  %225 = vmatpush.msra.mxu0 %v35
  %226 = vmatpush.msra.mxu0 %v34
  %227 = vmatpush.msra.mxu0 %v33
  %228 = vmatpush.msra.mxu0 %v32
  %229 = vmatpush.msra.mxu0 %v31
  %230 = vmatmul.f32.gmra.mxu0 %v187
  %v231 = vpop.f32.mrf.mxu0
  %v232 = vadd.f32 0.0, %v231
  %233 = vdwg.mxu0
  %v234 = vadd.f32 %v213, %v232
  %v235 = vmax.f32 %v234, 0.0
  %v236 = vmin.f32 %v235, 1.0
  %s237 = scalar_lea.vmem %s5, 6
  %238 = vst [vmem:[%s237] sm:$0x3] %v236
  %239 = vmatpush.msra.mxu0 %v62
  %240 = vmatpush.msra.mxu0 %v61
  %241 = vmatpush.msra.mxu0 %v60
  %242 = vmatpush.msra.mxu0 %v59
  %243 = vmatpush.msra.mxu0 %v58
  %244 = vmatpush.msra.mxu0 %v57
  %245 = vmatpush.msra.mxu0 %v56
  %246 = vmatpush.msra.mxu0 %v55
  %247 = vmatpush.msra.mxu0 %v54
  %248 = vmatpush.msra.mxu0 %v53
  %249 = vmatpush.msra.mxu0 %v52
  %250 = vmatpush.msra.mxu0 %v51
  %251 = vmatpush.msra.mxu0 %v50
  %252 = vmatpush.msra.mxu0 %v49
  %253 = vmatpush.msra.mxu0 %v48
  %254 = vmatpush.msra.mxu0 %v47
  %255 = vmatmul.f32.gmra.mxu0 %v236
  %v256 = vpop.f32.mrf.mxu0
  %v257 = vadd.f32 %v91, %v256
  %258 = vdwg.mxu0
  %s259 = scalar_lea.vmem %s6, 6
  %260 = vst [vmem:[%s259] sm:$0x3] %v257
  %s261 = scalar_lea.vmem %s0, 8
  %v262 = vld [vmem:[%s261] sm:$0x3]
  %263 = vmatpush.msra.mxu0 %v46
  %264 = vmatpush.msra.mxu0 %v45
  %265 = vmatpush.msra.mxu0 %v44
  %266 = vmatpush.msra.mxu0 %v43
  %267 = vmatpush.msra.mxu0 %v42
  %268 = vmatpush.msra.mxu0 %v41
  %269 = vmatpush.msra.mxu0 %v40
  %270 = vmatpush.msra.mxu0 %v39
  %271 = vmatpush.msra.mxu0 %v38
  %272 = vmatpush.msra.mxu0 %v37
  %273 = vmatpush.msra.mxu0 %v36
  %274 = vmatpush.msra.mxu0 %v35
  %275 = vmatpush.msra.mxu0 %v34
  %276 = vmatpush.msra.mxu0 %v33
  %277 = vmatpush.msra.mxu0 %v32
  %278 = vmatpush.msra.mxu0 %v31
  %279 = vmatmul.f32.gmra.mxu0 %v236
  %v280 = vpop.f32.mrf.mxu0
  %v281 = vadd.f32 0.0, %v280
  %282 = vdwg.mxu0
  %v283 = vadd.f32 %v262, %v281
  %v284 = vmax.f32 %v283, 0.0
  %v285 = vmin.f32 %v284, 1.0
  %s286 = scalar_lea.vmem %s5, 8
  %287 = vst [vmem:[%s286] sm:$0x3] %v285
  %288 = vmatpush.msra.mxu0 %v62
  %289 = vmatpush.msra.mxu0 %v61
  %290 = vmatpush.msra.mxu0 %v60
  %291 = vmatpush.msra.mxu0 %v59
  %292 = vmatpush.msra.mxu0 %v58
  %293 = vmatpush.msra.mxu0 %v57
  %294 = vmatpush.msra.mxu0 %v56
  %295 = vmatpush.msra.mxu0 %v55
  %296 = vmatpush.msra.mxu0 %v54
  %297 = vmatpush.msra.mxu0 %v53
  %298 = vmatpush.msra.mxu0 %v52
  %299 = vmatpush.msra.mxu0 %v51
  %300 = vmatpush.msra.mxu0 %v50
  %301 = vmatpush.msra.mxu0 %v49
  %302 = vmatpush.msra.mxu0 %v48
  %303 = vmatpush.msra.mxu0 %v47
  %304 = vmatmul.f32.gmra.mxu0 %v285
  %v305 = vpop.f32.mrf.mxu0
  %v306 = vadd.f32 %v91, %v305
  %307 = vdwg.mxu0
  %s308 = scalar_lea.vmem %s6, 8
  %309 = vst [vmem:[%s308] sm:$0x3] %v306
  %s310 = scalar_lea.vmem %s0, 10
  %v311 = vld [vmem:[%s310] sm:$0x3]
  %312 = vmatpush.msra.mxu0 %v46
  %313 = vmatpush.msra.mxu0 %v45
  %314 = vmatpush.msra.mxu0 %v44
  %315 = vmatpush.msra.mxu0 %v43
  %316 = vmatpush.msra.mxu0 %v42
  %317 = vmatpush.msra.mxu0 %v41
  %318 = vmatpush.msra.mxu0 %v40
  %319 = vmatpush.msra.mxu0 %v39
  %320 = vmatpush.msra.mxu0 %v38
  %321 = vmatpush.msra.mxu0 %v37
  %322 = vmatpush.msra.mxu0 %v36
  %323 = vmatpush.msra.mxu0 %v35
  %324 = vmatpush.msra.mxu0 %v34
  %325 = vmatpush.msra.mxu0 %v33
  %326 = vmatpush.msra.mxu0 %v32
  %327 = vmatpush.msra.mxu0 %v31
  %328 = vmatmul.f32.gmra.mxu0 %v285
  %v329 = vpop.f32.mrf.mxu0
  %v330 = vadd.f32 0.0, %v329
  %331 = vdwg.mxu0
  %v332 = vadd.f32 %v311, %v330
  %v333 = vmax.f32 %v332, 0.0
  %v334 = vmin.f32 %v333, 1.0
  %s335 = scalar_lea.vmem %s5, 10
  %336 = vst [vmem:[%s335] sm:$0x3] %v334
  %337 = vmatpush.msra.mxu0 %v62
  %338 = vmatpush.msra.mxu0 %v61
  %339 = vmatpush.msra.mxu0 %v60
  %340 = vmatpush.msra.mxu0 %v59
  %341 = vmatpush.msra.mxu0 %v58
  %342 = vmatpush.msra.mxu0 %v57
  %343 = vmatpush.msra.mxu0 %v56
  %344 = vmatpush.msra.mxu0 %v55
  %345 = vmatpush.msra.mxu0 %v54
  %346 = vmatpush.msra.mxu0 %v53
  %347 = vmatpush.msra.mxu0 %v52
  %348 = vmatpush.msra.mxu0 %v51
  %349 = vmatpush.msra.mxu0 %v50
  %350 = vmatpush.msra.mxu0 %v49
  %351 = vmatpush.msra.mxu0 %v48
  %352 = vmatpush.msra.mxu0 %v47
  %353 = vmatmul.f32.gmra.mxu0 %v334
  %v354 = vpop.f32.mrf.mxu0
  %v355 = vadd.f32 %v91, %v354
  %356 = vdwg.mxu0
  %s357 = scalar_lea.vmem %s6, 10
  %358 = vst [vmem:[%s357] sm:$0x3] %v355
  %s359 = scalar_lea.vmem %s0, 12
  %v360 = vld [vmem:[%s359] sm:$0x3]
  %361 = vmatpush.msra.mxu0 %v46
  %362 = vmatpush.msra.mxu0 %v45
  %363 = vmatpush.msra.mxu0 %v44
  %364 = vmatpush.msra.mxu0 %v43
  %365 = vmatpush.msra.mxu0 %v42
  %366 = vmatpush.msra.mxu0 %v41
  %367 = vmatpush.msra.mxu0 %v40
  %368 = vmatpush.msra.mxu0 %v39
  %369 = vmatpush.msra.mxu0 %v38
  %370 = vmatpush.msra.mxu0 %v37
  %371 = vmatpush.msra.mxu0 %v36
  %372 = vmatpush.msra.mxu0 %v35
  %373 = vmatpush.msra.mxu0 %v34
  %374 = vmatpush.msra.mxu0 %v33
  %375 = vmatpush.msra.mxu0 %v32
  %376 = vmatpush.msra.mxu0 %v31
  %377 = vmatmul.f32.gmra.mxu0 %v334
  %v378 = vpop.f32.mrf.mxu0
  %v379 = vadd.f32 0.0, %v378
  %380 = vdwg.mxu0
  %v381 = vadd.f32 %v360, %v379
  %v382 = vmax.f32 %v381, 0.0
  %v383 = vmin.f32 %v382, 1.0
  %s384 = scalar_lea.vmem %s5, 12
  %385 = vst [vmem:[%s384] sm:$0x3] %v383
  %386 = vmatpush.msra.mxu0 %v62
  %387 = vmatpush.msra.mxu0 %v61
  %388 = vmatpush.msra.mxu0 %v60
  %389 = vmatpush.msra.mxu0 %v59
  %390 = vmatpush.msra.mxu0 %v58
  %391 = vmatpush.msra.mxu0 %v57
  %392 = vmatpush.msra.mxu0 %v56
  %393 = vmatpush.msra.mxu0 %v55
  %394 = vmatpush.msra.mxu0 %v54
  %395 = vmatpush.msra.mxu0 %v53
  %396 = vmatpush.msra.mxu0 %v52
  %397 = vmatpush.msra.mxu0 %v51
  %398 = vmatpush.msra.mxu0 %v50
  %399 = vmatpush.msra.mxu0 %v49
  %400 = vmatpush.msra.mxu0 %v48
  %401 = vmatpush.msra.mxu0 %v47
  %402 = vmatmul.f32.gmra.mxu0 %v383
  %v403 = vpop.f32.mrf.mxu0
  %v404 = vadd.f32 %v91, %v403
  %405 = vdwg.mxu0
  %s406 = scalar_lea.vmem %s6, 12
  %407 = vst [vmem:[%s406] sm:$0x3] %v404
  %s408 = scalar_lea.vmem %s0, 14
  %v409 = vld [vmem:[%s408] sm:$0x3]
  %410 = vmatpush.msra.mxu0 %v46
  %411 = vmatpush.msra.mxu0 %v45
  %412 = vmatpush.msra.mxu0 %v44
  %413 = vmatpush.msra.mxu0 %v43
  %414 = vmatpush.msra.mxu0 %v42
  %415 = vmatpush.msra.mxu0 %v41
  %416 = vmatpush.msra.mxu0 %v40
  %417 = vmatpush.msra.mxu0 %v39
  %418 = vmatpush.msra.mxu0 %v38
  %419 = vmatpush.msra.mxu0 %v37
  %420 = vmatpush.msra.mxu0 %v36
  %421 = vmatpush.msra.mxu0 %v35
  %422 = vmatpush.msra.mxu0 %v34
  %423 = vmatpush.msra.mxu0 %v33
  %424 = vmatpush.msra.mxu0 %v32
  %425 = vmatpush.msra.mxu0 %v31
  %426 = vmatmul.f32.gmra.mxu0 %v383
  %v427 = vpop.f32.mrf.mxu0
  %v428 = vadd.f32 0.0, %v427
  %429 = vdwg.mxu0
  %v430 = vadd.f32 %v409, %v428
  %v431 = vmax.f32 %v430, 0.0
  %v432 = vmin.f32 %v431, 1.0
  %s433 = scalar_lea.vmem %s5, 14
  %434 = vst [vmem:[%s433] sm:$0x3] %v432
  %435 = vmatpush.msra.mxu0 %v62
  %436 = vmatpush.msra.mxu0 %v61
  %437 = vmatpush.msra.mxu0 %v60
  %438 = vmatpush.msra.mxu0 %v59
  %439 = vmatpush.msra.mxu0 %v58
  %440 = vmatpush.msra.mxu0 %v57
  %441 = vmatpush.msra.mxu0 %v56
  %442 = vmatpush.msra.mxu0 %v55
  %443 = vmatpush.msra.mxu0 %v54
  %444 = vmatpush.msra.mxu0 %v53
  %445 = vmatpush.msra.mxu0 %v52
  %446 = vmatpush.msra.mxu0 %v51
  %447 = vmatpush.msra.mxu0 %v50
  %448 = vmatpush.msra.mxu0 %v49
  %449 = vmatpush.msra.mxu0 %v48
  %450 = vmatpush.msra.mxu0 %v47
  %451 = vmatmul.f32.gmra.mxu0 %v432
  %v452 = vpop.f32.mrf.mxu0
  %v453 = vadd.f32 %v91, %v452
  %454 = vdwg.mxu0
  %s455 = scalar_lea.vmem %s6, 14
  %456 = vst [vmem:[%s455] sm:$0x3] %v453
  %457 = vst [vmem:[#allocation2] sm:$0x3] %v432
  // Predicated region
  $region26: #{simple_rnn_forward.3} parent=0 // pred_check
    _
  $region27: #{simple_rnn_forward.3} parent=0 // pred_check_branch
    %459 = sbr.rel (0) target = $region29
  $region28: #{simple_rnn_forward.3} parent=0 // pred_region
    _
  $region29: #{simple_rnn_forward.3} parent=0 // pred_fallthru
    _
  // Predicated region
  $region30: #{simple_rnn_forward.3} parent=0 // pred_check
    _
  $region31: #{simple_rnn_forward.3} parent=0 // pred_check_branch
    %461 = sbr.rel (0) target = $region33
  $region32: #{simple_rnn_forward.3} parent=0 // pred_region
    _
  $region33: #{simple_rnn_forward.3} parent=0 // pred_fallthru
    _
  // Predicated region
  $region34: #{simple_rnn_forward.3} parent=0 // pred_check
    _
  $region35: #{simple_rnn_forward.3} parent=0 // pred_check_branch
    %463 = sbr.rel (0) target = $region37
  $region36: #{simple_rnn_forward.3} parent=0 // pred_region
    _
  $region37: #{simple_rnn_forward.3} parent=0 // pred_fallthru
    _
  // Predicated region
  $region38: #{simple_rnn_forward.3} parent=0 // pred_check
    _
  $region39: #{simple_rnn_forward.3} parent=0 // pred_check_branch
    %465 = sbr.rel (0) target = $region41
  $region40: #{simple_rnn_forward.3} parent=0 // pred_region
    _
  $region41: #{simple_rnn_forward.3} parent=0 // pred_fallthru
    _

</llo_original>
